<compile_context>
chip_gen: v7x
topology: tpu7x:2x2x1
jax: 0.10.0
libtpu: 0.0.40
codegen_flags: <defaults>
</compile_context>

<pallas_src>
import functools

import jax
import jax.numpy as jnp
from jax.experimental import pallas as pl
from jax.experimental.pallas import tpu as pltpu

# dropout rates referenced as globals by the original script (d2l defaults)
dropout1 = 0.2
dropout2 = 0.5


def _round_up(n, m):
    return ((n + m - 1) // m) * m


def _forward_body(x_ref, w1_ref, b1_ref, w2_ref, b2_ref, w3_ref, b3_ref, m1, m2):
    """Shared body: 3 bf16 matmuls (f32 accumulate) + f32 bias/ReLU/dropout."""
    h1 = jnp.dot(x_ref[...], w1_ref[...],
                 preferred_element_type=jnp.float32) + b1_ref[...]
    h1 = jnp.maximum(h1, 0.0)
    if m1 is not None:
        h1 = h1 * m1                          # mask already holds 0 or 1/(1-p)
    h2 = jnp.dot(h1.astype(jnp.bfloat16), w2_ref[...],
                 preferred_element_type=jnp.float32) + b2_ref[...]
    h2 = jnp.maximum(h2, 0.0)
    if m2 is not None:
        h2 = h2 * m2
    return jnp.dot(h2.astype(jnp.bfloat16), w3_ref[...],
                   preferred_element_type=jnp.float32) + b3_ref[...]


def mlp_train_kernel(x_ref, w1_ref, b1_ref, w2_ref, b2_ref, w3_ref, b3_ref,
                     m1_ref, m2_ref, o_ref):
    out = _forward_body(x_ref, w1_ref, b1_ref, w2_ref, b2_ref, w3_ref, b3_ref,
                        m1_ref[...].astype(jnp.float32),
                        m2_ref[...].astype(jnp.float32))
    o_ref[...] = out.astype(o_ref.dtype)


def mlp_eval_kernel(x_ref, w1_ref, b1_ref, w2_ref, b2_ref, w3_ref, b3_ref, o_ref):
    out = _forward_body(x_ref, w1_ref, b1_ref, w2_ref, b2_ref, w3_ref, b3_ref,
                        None, None)
    o_ref[...] = out.astype(o_ref.dtype)


def _dropout_mask(key, shape, rate):
    """Matches torch dropout_layer: keep = (rand > rate); scale by 1/(1-rate).

    Stored as bf16 (0.0 or 1/(1-rate)) to halve the HBM bytes streamed per tile.
    Both 1.25 (p=0.2) and 2.0 (p=0.5) are exact in bf16.
    """
    if rate == 0.0:
        return jnp.ones(shape, jnp.bfloat16)
    if rate == 1.0:
        return jnp.zeros(shape, jnp.bfloat16)
    keep = jax.random.uniform(key, shape, jnp.float32) > rate
    return (keep.astype(jnp.float32) * (1.0 / (1.0 - rate))).astype(jnp.bfloat16)


def init_net_params(key, num_inputs, num_outputs, num_hiddens1, num_hiddens2):
    """PyTorch-style Linear init: U(-1/sqrt(fan_in), 1/sqrt(fan_in)).

    Weights are stored transposed: (in_features, out_features).
    """
    def linear(k, fan_in, fan_out):
        kw, kb = jax.random.split(k)
        bound = 1.0 / jnp.sqrt(float(fan_in))
        w = jax.random.uniform(kw, (fan_in, fan_out), jnp.float32, -bound, bound)
        b = jax.random.uniform(kb, (fan_out,), jnp.float32, -bound, bound)
        return w, b

    k1, k2, k3 = jax.random.split(key, 3)
    w1, b1 = linear(k1, num_inputs, num_hiddens1)
    w2, b2 = linear(k2, num_hiddens1, num_hiddens2)
    w3, b3 = linear(k3, num_hiddens2, num_outputs)
    return (w1, b1, w2, b2, w3, b3)


def net_forward(x, params, key, *, num_inputs, is_training=True, tile_b=512):
    """X.reshape(-1, num_inputs) -> fused MLP. `key` must differ per training step."""
    w1, b1, w2, b2, w3, b3 = params
    xf = x.reshape((-1, num_inputs)).astype(jnp.float32)
    batch = xf.shape[0]
    h1_dim, h2_dim = w1.shape[1], w2.shape[1]
    num_outputs = w3.shape[1]

    # Batch tile: multiple of 8 sublanes, up to `tile_b` rows; pad batch to a multiple
    # of the tile so the grid covers it exactly (padding rows are discarded at the end).
    tb = min(tile_b, _round_up(batch, 8))
    padded = _round_up(batch, tb)
    if padded != batch:
        xf = jnp.pad(xf, ((0, padded - batch), (0, 0)))
    grid = (padded // tb,)

    # bf16 inputs to the MXU; biases stay f32.
    xb = xf.astype(jnp.bfloat16)
    w1b, w2b, w3b = (w.astype(jnp.bfloat16) for w in (w1, w2, w3))
    b1r, b2r, b3r = (b.reshape(1, -1).astype(jnp.float32) for b in (b1, b2, b3))

    tiled = lambda cols: pl.BlockSpec((tb, cols), lambda i: (i, 0))
    resident = lambda shape: pl.BlockSpec(shape, lambda i: (0, 0))  # weights stay put

    in_specs = [
        tiled(num_inputs),
        resident((num_inputs, h1_dim)), resident((1, h1_dim)),
        resident((h1_dim, h2_dim)), resident((1, h2_dim)),
        resident((h2_dim, num_outputs)), resident((1, num_outputs)),
    ]
    args = [xb, w1b, b1r, w2b, b2r, w3b, b3r]

    if is_training:
        k1, k2 = jax.random.split(key)
        args += [_dropout_mask(k1, (padded, h1_dim), dropout1),
                 _dropout_mask(k2, (padded, h2_dim), dropout2)]
        in_specs += [tiled(h1_dim), tiled(h2_dim)]
        kernel = mlp_train_kernel
    else:
        kernel = mlp_eval_kernel

    out = pl.pallas_call(
        kernel,
        out_shape=jax.ShapeDtypeStruct((padded, num_outputs), jnp.float32),
        grid=grid,
        in_specs=in_specs,
        out_specs=tiled(num_outputs),
        compiler_params=pltpu.CompilerParams(
            dimension_semantics=("parallel",)),  # v7x: shard batch tiles across TCs
    )(*args)
    return out[:batch]


def _reference_eval(x, params, num_inputs):
    """Pure-JAX f32 reference of the eval-mode forward (no dropout)."""
    w1, b1, w2, b2, w3, b3 = params
    h = x.reshape((-1, num_inputs)).astype(jnp.float32)
    h = jnp.maximum(h @ w1 + b1, 0.0)
    h = jnp.maximum(h @ w2 + b2, 0.0)
    return h @ w3 + b3


if __name__ == "__main__":
    # Small shapes consistent with the module: X flattens to num_inputs.
    num_inputs, num_outputs = 256, 16
    num_hiddens1, num_hiddens2 = 128, 64
    batch = 2

    key = jax.random.PRNGKey(0)
    kx, kp, kd = jax.random.split(key, 3)
    x = jax.random.normal(kx, (batch, 16, 16), jnp.float32)  # -> (2, 256)
    params = init_net_params(kp, num_inputs, num_outputs, num_hiddens1, num_hiddens2)

    # Training-mode forward (dropout active; fresh key per call/step).
    out_train = jax.block_until_ready(
        net_forward(x, params, kd, num_inputs=num_inputs, is_training=True))
    assert out_train.shape == (batch, num_outputs), out_train.shape

    # Eval-mode forward (no dropout) + loose check against an f32 reference
    # (kernel uses bf16 matmul inputs with f32 accumulation).
    out_eval = jax.block_until_ready(
        net_forward(x, params, kd, num_inputs=num_inputs, is_training=False))
    assert out_eval.shape == (batch, num_outputs)
    ref = _reference_eval(x, params, num_inputs)
    assert jnp.allclose(out_eval, ref, rtol=5e-2, atol=5e-2), (
        float(jnp.max(jnp.abs(out_eval - ref))))

    print("KERNEL_OK")
</pallas_src>

<mosaic_0001>
module attributes {stable_mosaic.version = 11 : i64} {
  func.func @mlp_train_kernel(%arg0: i32, %arg1: memref<8x256xbf16, #tpu.memory_space<vmem>>, %arg2: memref<256x128xbf16, #tpu.memory_space<vmem>>, %arg3: memref<1x128xf32, #tpu.memory_space<vmem>>, %arg4: memref<128x64xbf16, #tpu.memory_space<vmem>>, %arg5: memref<1x64xf32, #tpu.memory_space<vmem>>, %arg6: memref<64x16xbf16, #tpu.memory_space<vmem>>, %arg7: memref<1x16xf32, #tpu.memory_space<vmem>>, %arg8: memref<8x128xbf16, #tpu.memory_space<vmem>>, %arg9: memref<8x64xbf16, #tpu.memory_space<vmem>>, %arg10: memref<8x16xf32, #tpu.memory_space<vmem>>) attributes {dimension_semantics = [#tpu.dimension_semantics<parallel>], iteration_bounds = array<i64: 1>, scalar_prefetch = 0 : i64, scratch_operands = 0 : i64, tpu.core_type = #tpu.core_type<tc>, window_params = [{transform_indices = @transform_0, window_bounds = array<i64: 8, 256>}, {pipeline_mode = #tpu.pipeline_mode<synchronous>, transform_indices = @transform_1, window_bounds = array<i64: 256, 128>}, {pipeline_mode = #tpu.pipeline_mode<synchronous>, transform_indices = @transform_2, window_bounds = array<i64: 1, 128>}, {pipeline_mode = #tpu.pipeline_mode<synchronous>, transform_indices = @transform_3, window_bounds = array<i64: 128, 64>}, {pipeline_mode = #tpu.pipeline_mode<synchronous>, transform_indices = @transform_4, window_bounds = array<i64: 1, 64>}, {pipeline_mode = #tpu.pipeline_mode<synchronous>, transform_indices = @transform_5, window_bounds = array<i64: 64, 16>}, {pipeline_mode = #tpu.pipeline_mode<synchronous>, transform_indices = @transform_6, window_bounds = array<i64: 1, 16>}, {transform_indices = @transform_7, window_bounds = array<i64: 8, 128>}, {transform_indices = @transform_8, window_bounds = array<i64: 8, 64>}, {transform_indices = @transform_9, window_bounds = array<i64: 8, 16>}]} {
    %c0 = arith.constant 0 : index
    %c0_0 = arith.constant 0 : index
    %0 = vector.load %arg8[%c0, %c0_0] : memref<8x128xbf16, #tpu.memory_space<vmem>>, vector<8x128xbf16>
    %1 = arith.extf %0 : vector<8x128xbf16> to vector<8x128xf32>
    %c0_1 = arith.constant 0 : index
    %c0_2 = arith.constant 0 : index
    %2 = vector.load %arg9[%c0_1, %c0_2] : memref<8x64xbf16, #tpu.memory_space<vmem>>, vector<8x64xbf16>
    %3 = arith.extf %2 : vector<8x64xbf16> to vector<8x64xf32>
    %c0_3 = arith.constant 0 : index
    %c0_4 = arith.constant 0 : index
    %4 = vector.load %arg1[%c0_3, %c0_4] : memref<8x256xbf16, #tpu.memory_space<vmem>>, vector<8x256xbf16>
    %c0_5 = arith.constant 0 : index
    %c0_6 = arith.constant 0 : index
    %5 = vector.load %arg2[%c0_5, %c0_6] : memref<256x128xbf16, #tpu.memory_space<vmem>>, vector<256x128xbf16>
    %cst = arith.constant dense<0.000000e+00> : vector<8x128xf32>
    %6 = tpu.matmul %4, %5, %cst {dimension_numbers = #tpu.dot_dimension_numbers<[1], [0], [0], [1], [0, 0, 1, 1], [], []>} : vector<8x256xbf16>, vector<256x128xbf16>, vector<8x128xf32> -> vector<8x128xf32>
    %c0_7 = arith.constant 0 : index
    %c0_8 = arith.constant 0 : index
    %7 = vector.load %arg3[%c0_7, %c0_8] : memref<1x128xf32, #tpu.memory_space<vmem>>, vector<1x128xf32>
    %8 = vector.broadcast %7 : vector<1x128xf32> to vector<8x128xf32>
    %9 = arith.addf %6, %8 : vector<8x128xf32>
    %cst_9 = arith.constant 0.000000e+00 : f32
    %10 = vector.broadcast %cst_9 : f32 to vector<8x128xf32>
    %11 = arith.maximumf %9, %10 : vector<8x128xf32>
    %12 = arith.mulf %11, %1 : vector<8x128xf32>
    %13 = arith.truncf %12 : vector<8x128xf32> to vector<8x128xbf16>
    %c0_10 = arith.constant 0 : index
    %c0_11 = arith.constant 0 : index
    %14 = vector.load %arg4[%c0_10, %c0_11] : memref<128x64xbf16, #tpu.memory_space<vmem>>, vector<128x64xbf16>
    %cst_12 = arith.constant dense<0.000000e+00> : vector<8x64xf32>
    %15 = tpu.matmul %13, %14, %cst_12 {dimension_numbers = #tpu.dot_dimension_numbers<[1], [0], [0], [1], [0, 0, 1, 1], [], []>} : vector<8x128xbf16>, vector<128x64xbf16>, vector<8x64xf32> -> vector<8x64xf32>
    %c0_13 = arith.constant 0 : index
    %c0_14 = arith.constant 0 : index
    %16 = vector.load %arg5[%c0_13, %c0_14] : memref<1x64xf32, #tpu.memory_space<vmem>>, vector<1x64xf32>
    %17 = vector.broadcast %16 : vector<1x64xf32> to vector<8x64xf32>
    %18 = arith.addf %15, %17 : vector<8x64xf32>
    %cst_15 = arith.constant 0.000000e+00 : f32
    %19 = vector.broadcast %cst_15 : f32 to vector<8x64xf32>
    %20 = arith.maximumf %18, %19 : vector<8x64xf32>
    %21 = arith.mulf %20, %3 : vector<8x64xf32>
    %22 = arith.truncf %21 : vector<8x64xf32> to vector<8x64xbf16>
    %c0_16 = arith.constant 0 : index
    %c0_17 = arith.constant 0 : index
    %23 = vector.load %arg6[%c0_16, %c0_17] : memref<64x16xbf16, #tpu.memory_space<vmem>>, vector<64x16xbf16>
    %cst_18 = arith.constant dense<0.000000e+00> : vector<8x16xf32>
    %24 = tpu.matmul %22, %23, %cst_18 {dimension_numbers = #tpu.dot_dimension_numbers<[1], [0], [0], [1], [0, 0, 1, 1], [], []>} : vector<8x64xbf16>, vector<64x16xbf16>, vector<8x16xf32> -> vector<8x16xf32>
    %c0_19 = arith.constant 0 : index
    %c0_20 = arith.constant 0 : index
    %25 = vector.load %arg7[%c0_19, %c0_20] : memref<1x16xf32, #tpu.memory_space<vmem>>, vector<1x16xf32>
    %26 = vector.broadcast %25 : vector<1x16xf32> to vector<8x16xf32>
    %27 = arith.addf %24, %26 : vector<8x16xf32>
    %c0_21 = arith.constant 0 : index
    %c0_22 = arith.constant 0 : index
    %28 = vector.load %arg10[%c0_21, %c0_22] : memref<8x16xf32, #tpu.memory_space<vmem>>, vector<8x16xf32>
    tpu.vector_store %arg10[%c0_21, %c0_22], %27 {strides = array<i32>} : memref<8x16xf32, #tpu.memory_space<vmem>>, vector<8x16xf32>,
    return
  }
  func.func @transform_0(%arg0: i32) -> (i32, i32) {
    %c0_i32 = arith.constant 0 : i32
    %c0_i32_0 = arith.constant 0 : i32
    return %arg0, %c0_i32 : i32, i32
  }
  func.func @transform_1(%arg0: i32) -> (i32, i32) {
    %c0_i32 = arith.constant 0 : i32
    %c0_i32_0 = arith.constant 0 : i32
    %c0_i32_1 = arith.constant 0 : i32
    return %c0_i32, %c0_i32_0 : i32, i32
  }
  func.func @transform_2(%arg0: i32) -> (i32, i32) {
    %c0_i32 = arith.constant 0 : i32
    %c0_i32_0 = arith.constant 0 : i32
    %c0_i32_1 = arith.constant 0 : i32
    return %c0_i32, %c0_i32_0 : i32, i32
  }
  func.func @transform_3(%arg0: i32) -> (i32, i32) {
    %c0_i32 = arith.constant 0 : i32
    %c0_i32_0 = arith.constant 0 : i32
    %c0_i32_1 = arith.constant 0 : i32
    return %c0_i32, %c0_i32_0 : i32, i32
  }
  func.func @transform_4(%arg0: i32) -> (i32, i32) {
    %c0_i32 = arith.constant 0 : i32
    %c0_i32_0 = arith.constant 0 : i32
    %c0_i32_1 = arith.constant 0 : i32
    return %c0_i32, %c0_i32_0 : i32, i32
  }
  func.func @transform_5(%arg0: i32) -> (i32, i32) {
    %c0_i32 = arith.constant 0 : i32
    %c0_i32_0 = arith.constant 0 : i32
    %c0_i32_1 = arith.constant 0 : i32
    return %c0_i32, %c0_i32_0 : i32, i32
  }
  func.func @transform_6(%arg0: i32) -> (i32, i32) {
    %c0_i32 = arith.constant 0 : i32
    %c0_i32_0 = arith.constant 0 : i32
    %c0_i32_1 = arith.constant 0 : i32
    return %c0_i32, %c0_i32_0 : i32, i32
  }
  func.func @transform_7(%arg0: i32) -> (i32, i32) {
    %c0_i32 = arith.constant 0 : i32
    %c0_i32_0 = arith.constant 0 : i32
    return %arg0, %c0_i32 : i32, i32
  }
  func.func @transform_8(%arg0: i32) -> (i32, i32) {
    %c0_i32 = arith.constant 0 : i32
    %c0_i32_0 = arith.constant 0 : i32
    return %arg0, %c0_i32 : i32, i32
  }
  func.func @transform_9(%arg0: i32) -> (i32, i32) {
    %c0_i32 = arith.constant 0 : i32
    %c0_i32_0 = arith.constant 0 : i32
    return %arg0, %c0_i32 : i32, i32
  }
}

</mosaic_0001>

<llo_original>
// kernel: tpu_custom_call.1
$region0: #{tpu_custom_call.1}
  #allocation0 [shape = 'u32[]', space=smem, size = 0x4, offset = 0x4, fixed_abs, tag = 'smem constant byte address 0x4 - core index']
  #allocation1 [shape = 'u32[144,128]{1,0:T(1,128)}', space=vmem, size = 0x12000, scoped, tag = 'internal scratch']
  %s0 = inlined_call_operand.vmem [shape: bf16[8,256], index: 0, kind: input, shape index: {}]
  %s1 = inlined_call_operand.vmem [shape: bf16[256,128], index: 1, kind: input, shape index: {}]
  %s2 = inlined_call_operand.vmem [shape: f32[1,128], index: 2, kind: input, shape index: {}]
  %s3 = inlined_call_operand.vmem [shape: bf16[128,64], index: 3, kind: input, shape index: {}]
  %s4 = inlined_call_operand.vmem [shape: f32[1,64], index: 4, kind: input, shape index: {}]
  %s5 = inlined_call_operand.vmem [shape: bf16[64,16], index: 5, kind: input, shape index: {}]
  %s6 = inlined_call_operand.vmem [shape: f32[1,16], index: 6, kind: input, shape index: {}]
  %s7 = inlined_call_operand.vmem [shape: bf16[8,128], index: 7, kind: input, shape index: {}]
  %s8 = inlined_call_operand.vmem [shape: bf16[8,64], index: 8, kind: input, shape index: {}]
  %s9 = inlined_call_operand.hbm [shape: f32[8,16], index: 9, kind: output, shape index: {}]
  %s10 = sld [smem:[#allocation0]]
  $region46: #{tpu_custom_call.1} parent=0
    _
  %s12 = ssub.s32 1, %s10
  %s13 = scalar_select 0, %s12, %s10
  $region1: #{tpu_custom_call.1} parent=0
    #allocation2 [shape = 'u8[4096]{0}', space=vmem, size = 0x1000, scoped, tag = 'output window, operand 0, single buffered']
    #allocation3 [shape = 's32[1]{0}', space=sflag, size = 0x4, scoped, tag = 'scoped memory for tpu_custom_call.1']
    %14 = vsyncpa [#allocation3], 0
    // Predicated region
    $region2: #{tpu_custom_call.1} parent=1 // pred_check
      _
    $region3: #{tpu_custom_call.1} parent=1 // pred_check_branch
      %16 = sbr.rel (0) target = $region5
    $region4: #{tpu_custom_call.1} parent=1 // pred_region
      _
    $region5: #{tpu_custom_call.1} parent=1 // pred_fallthru
      _
    // Predicated region
    $region6: #{tpu_custom_call.1} parent=1 // pred_check
      _
    $region7: #{tpu_custom_call.1} parent=1 // pred_check_branch
      %18 = sbr.rel (0) target = $region9
    $region8: #{tpu_custom_call.1} parent=1 // pred_region
      _
    $region9: #{tpu_custom_call.1} parent=1 // pred_fallthru
      _
    // Predicated region
    $region10: #{tpu_custom_call.1} parent=1 // pred_check
      _
    $region11: #{tpu_custom_call.1} parent=1 // pred_check_branch
      %20 = sbr.rel (0) target = $region13
    $region12: #{tpu_custom_call.1} parent=1 // pred_region
      _
    $region13: #{tpu_custom_call.1} parent=1 // pred_fallthru
      _
    // Predicated region
    $region14: #{tpu_custom_call.1} parent=1 // pred_check
      _
    $region15: #{tpu_custom_call.1} parent=1 // pred_check_branch
      %22 = sbr.rel (0) target = $region17
    $region16: #{tpu_custom_call.1} parent=1 // pred_region
      _
    $region17: #{tpu_custom_call.1} parent=1 // pred_fallthru
      _
    // Predicated region
    $region18: #{tpu_custom_call.1} parent=1 // pred_check
      _
    $region19: #{tpu_custom_call.1} parent=1 // pred_check_branch
      %24 = sbr.rel (0) target = $region21
    $region20: #{tpu_custom_call.1} parent=1 // pred_region
      _
    $region21: #{tpu_custom_call.1} parent=1 // pred_fallthru
      _
    // Predicated region
    $region22: #{tpu_custom_call.1} parent=1 // pred_check
      _
    $region23: #{tpu_custom_call.1} parent=1 // pred_check_branch
      %26 = sbr.rel (0) target = $region25
    $region24: #{tpu_custom_call.1} parent=1 // pred_region
      _
    $region25: #{tpu_custom_call.1} parent=1 // pred_fallthru
      _
    // Predicated region
    $region26: #{tpu_custom_call.1} parent=1 // pred_check
      _
    $region27: #{tpu_custom_call.1} parent=1 // pred_check_branch
      %28 = sbr.rel (0) target = $region29
    $region28: #{tpu_custom_call.1} parent=1 // pred_region
      _
    $region29: #{tpu_custom_call.1} parent=1 // pred_fallthru
      _
    // Predicated region
    $region30: #{tpu_custom_call.1} parent=1 // pred_check
      _
    $region31: #{tpu_custom_call.1} parent=1 // pred_check_branch
      %30 = sbr.rel (0) target = $region33
    $region32: #{tpu_custom_call.1} parent=1 // pred_region
      _
    $region33: #{tpu_custom_call.1} parent=1 // pred_fallthru
      _
    // Predicated region
    $region34: #{tpu_custom_call.1} parent=1 // pred_check
      _
    $region35: #{tpu_custom_call.1} parent=1 // pred_check_branch
      %32 = sbr.rel (0) target = $region37
    $region36: #{tpu_custom_call.1} parent=1 // pred_region
      _
    $region37: #{tpu_custom_call.1} parent=1 // pred_fallthru
      _
    %v34 = vld [vmem:[%s7] sm:$0xf]
    %v35 = vunpack.c.l.bf16 %v34
    %v36 = vld [vmem:[%s8] sm:$0xf]
    %v37 = vunpack.c.l.bf16 %v36
    %v38 = vld [vmem:[%s0] sm:$0xff]
    %v39 = vld [vmem:[%s1] sm:$0xf]
    %v40 = vld [vmem:[%s1 + $0x4] sm:$0xf]
    %v41 = vld [vmem:[%s1 + $0x8] sm:$0xf]
    %v42 = vld [vmem:[%s1 + $0xc] sm:$0xf]
    %v43 = vld [vmem:[%s1 + $0x10] sm:$0xf]
    %v44 = vld [vmem:[%s1 + $0x14] sm:$0xf]
    %v45 = vld [vmem:[%s1 + $0x18] sm:$0xf]
    %v46 = vld [vmem:[%s1 + $0x1c] sm:$0xf]
    %v47 = vld [vmem:[%s1 + $0x20] sm:$0xf]
    %v48 = vld [vmem:[%s1 + $0x24] sm:$0xf]
    %v49 = vld [vmem:[%s1 + $0x28] sm:$0xf]
    %v50 = vld [vmem:[%s1 + $0x2c] sm:$0xf]
    %v51 = vld [vmem:[%s1 + $0x30] sm:$0xf]
    %v52 = vld [vmem:[%s1 + $0x34] sm:$0xf]
    %v53 = vld [vmem:[%s1 + $0x38] sm:$0xf]
    %v54 = vld [vmem:[%s1 + $0x3c] sm:$0xf]
    %v55 = vld [vmem:[%s1 + $0x40] sm:$0xf]
    %v56 = vld [vmem:[%s1 + $0x44] sm:$0xf]
    %v57 = vld [vmem:[%s1 + $0x48] sm:$0xf]
    %v58 = vld [vmem:[%s1 + $0x4c] sm:$0xf]
    %v59 = vld [vmem:[%s1 + $0x50] sm:$0xf]
    %v60 = vld [vmem:[%s1 + $0x54] sm:$0xf]
    %v61 = vld [vmem:[%s1 + $0x58] sm:$0xf]
    %v62 = vld [vmem:[%s1 + $0x5c] sm:$0xf]
    %v63 = vld [vmem:[%s1 + $0x60] sm:$0xf]
    %v64 = vld [vmem:[%s1 + $0x64] sm:$0xf]
    %v65 = vld [vmem:[%s1 + $0x68] sm:$0xf]
    %v66 = vld [vmem:[%s1 + $0x6c] sm:$0xf]
    %v67 = vld [vmem:[%s1 + $0x70] sm:$0xf]
    %v68 = vld [vmem:[%s1 + $0x74] sm:$0xf]
    %v69 = vld [vmem:[%s1 + $0x78] sm:$0xf]
    %v70 = vld [vmem:[%s1 + $0x7c] sm:$0xf]
    %v71 = vld [vmem:[%s2] sm:$0x1]
    %v73 = vlaneseq
    %v74 = vshrl.u32 %v73, 7
    %v75 = vsub.s32 0, %v74
    %v76 = vrot.slane %v71, %v75
    %v79 = vunpack.c.l.b16 %v38
    %v80 = vunpack.c.h.b16 %v38
    %v81 = vpack.c.b16 %v79, %v79
    %v82 = vpack.c.b16 %v80, %v80
    %v117 = vunpack.c.l.b16 %v39
    %v118 = vunpack.c.l.b16 %v40
    %v119 = vunpack.c.l.b16 %v41
    %v120 = vunpack.c.l.b16 %v42
    %v121 = vunpack.c.l.b16 %v43
    %v122 = vunpack.c.l.b16 %v44
    %v123 = vunpack.c.l.b16 %v45
    %v124 = vunpack.c.l.b16 %v46
    %v125 = vunpack.c.l.b16 %v47
    %v126 = vunpack.c.l.b16 %v48
    %v127 = vunpack.c.l.b16 %v49
    %v128 = vunpack.c.l.b16 %v50
    %v129 = vunpack.c.l.b16 %v51
    %v130 = vunpack.c.l.b16 %v52
    %v131 = vunpack.c.l.b16 %v53
    %v132 = vunpack.c.l.b16 %v54
    %v133 = vunpack.c.l.b16 %v55
    %v134 = vunpack.c.l.b16 %v56
    %v135 = vunpack.c.l.b16 %v57
    %v136 = vunpack.c.l.b16 %v58
    %v137 = vunpack.c.l.b16 %v59
    %v138 = vunpack.c.l.b16 %v60
    %v139 = vunpack.c.l.b16 %v61
    %v140 = vunpack.c.l.b16 %v62
    %v141 = vunpack.c.l.b16 %v63
    %v142 = vunpack.c.l.b16 %v64
    %v143 = vunpack.c.l.b16 %v65
    %v144 = vunpack.c.l.b16 %v66
    %v145 = vunpack.c.l.b16 %v67
    %v146 = vunpack.c.l.b16 %v68
    %v147 = vunpack.c.l.b16 %v69
    %v148 = vunpack.c.l.b16 %v70
    %v149 = vpack.c.b16 %v118, %v117
    %v150 = vpack.c.b16 %v120, %v119
    %v151 = vpack.c.b16 %v122, %v121
    %v152 = vpack.c.b16 %v124, %v123
    %v153 = vpack.c.b16 %v126, %v125
    %v154 = vpack.c.b16 %v128, %v127
    %v155 = vpack.c.b16 %v130, %v129
    %v156 = vpack.c.b16 %v132, %v131
    %v157 = vpack.c.b16 %v134, %v133
    %v158 = vpack.c.b16 %v136, %v135
    %v159 = vpack.c.b16 %v138, %v137
    %v160 = vpack.c.b16 %v140, %v139
    %v161 = vpack.c.b16 %v142, %v141
    %v162 = vpack.c.b16 %v144, %v143
    %v163 = vpack.c.b16 %v146, %v145
    %v164 = vpack.c.b16 %v148, %v147
    %181 = vmatprep.subr.bf16.mxu0 0
    %182 = vmatpush1.bf16.msra.mxu0 %v149
    %183 = vmatprep.subr.bf16.mxu0 0
    %184 = vmatpush1.bf16.msra.mxu0 %v150
    %185 = vmatprep.subr.bf16.mxu0 0
    %186 = vmatpush1.bf16.msra.mxu0 %v151
    %187 = vmatprep.subr.bf16.mxu0 0
    %188 = vmatpush1.bf16.msra.mxu0 %v152
    %189 = vmatprep.subr.bf16.mxu0 0
    %190 = vmatpush1.bf16.msra.mxu0 %v153
    %191 = vmatprep.subr.bf16.mxu0 0
    %192 = vmatpush1.bf16.msra.mxu0 %v154
    %193 = vmatprep.subr.bf16.mxu0 0
    %194 = vmatpush1.bf16.msra.mxu0 %v155
    %195 = vmatprep.subr.bf16.mxu0 0
    %196 = vmatpush1.bf16.msra.mxu0 %v156
    %197 = vmatprep.subr.bf16.mxu0 0
    %198 = vmatpush1.bf16.msra.mxu0 %v157
    %199 = vmatprep.subr.bf16.mxu0 0
    %200 = vmatpush1.bf16.msra.mxu0 %v158
    %201 = vmatprep.subr.bf16.mxu0 0
    %202 = vmatpush1.bf16.msra.mxu0 %v159
    %203 = vmatprep.subr.bf16.mxu0 0
    %204 = vmatpush1.bf16.msra.mxu0 %v160
    %205 = vmatprep.subr.bf16.mxu0 0
    %206 = vmatpush1.bf16.msra.mxu0 %v161
    %207 = vmatprep.subr.bf16.mxu0 0
    %208 = vmatpush1.bf16.msra.mxu0 %v162
    %209 = vmatprep.subr.bf16.mxu0 0
    %210 = vmatpush1.bf16.msra.mxu0 %v163
    %211 = vmatprep.subr.bf16.mxu0 0
    %212 = vmatpush1.bf16.msra.mxu0 %v164
    %213 = vmatprep.mubr.bf16.mxu0 %v82
    %214 = vmatmul.mubr.bf16.gmra.mrb[0].mxu0 %v81
    %v215 = vpop.f32.mrb[0].mxu0
    %v216 = vadd.f32 %v76, %v215
    %v217 = vpop.f32.mrb[0].mxu0
    %v218 = vpop.f32.mrb[0].mxu0
    %v219 = vpop.f32.mrb[0].mxu0
    %220 = vdwg.mxu0
    %v221 = vmax.f32 %v216, 0.0
    %v222 = vmul.f32 %v221, %v35
    %v223 = vpack.c.bf16 %v222, %v222
    %v224 = vld [vmem:[%s3] sm:$0xf]
    %v225 = vld [vmem:[%s3 + $0x4] sm:$0xf]
    %v226 = vld [vmem:[%s3 + $0x8] sm:$0xf]
    %v227 = vld [vmem:[%s3 + $0xc] sm:$0xf]
    %v228 = vld [vmem:[%s3 + $0x10] sm:$0xf]
    %v229 = vld [vmem:[%s3 + $0x14] sm:$0xf]
    %v230 = vld [vmem:[%s3 + $0x18] sm:$0xf]
    %v231 = vld [vmem:[%s3 + $0x1c] sm:$0xf]
    %v232 = vld [vmem:[%s3 + $0x20] sm:$0xf]
    %v233 = vld [vmem:[%s3 + $0x24] sm:$0xf]
    %v234 = vld [vmem:[%s3 + $0x28] sm:$0xf]
    %v235 = vld [vmem:[%s3 + $0x2c] sm:$0xf]
    %v236 = vld [vmem:[%s3 + $0x30] sm:$0xf]
    %v237 = vld [vmem:[%s3 + $0x34] sm:$0xf]
    %v238 = vld [vmem:[%s3 + $0x38] sm:$0xf]
    %v239 = vld [vmem:[%s3 + $0x3c] sm:$0xf]
    %v240 = vld [vmem:[%s4] sm:$0x1]
    %v242 = vlaneseq
    %v243 = vshrl.u32 %v242, 7
    %v244 = vsub.s32 0, %v243
    %v245 = vrot.slane %v240, %v244
    %v263 = vunpack.c.l.b16 %v224
    %v264 = vunpack.c.l.b16 %v225
    %v265 = vunpack.c.l.b16 %v226
    %v266 = vunpack.c.l.b16 %v227
    %v267 = vunpack.c.l.b16 %v228
    %v268 = vunpack.c.l.b16 %v229
    %v269 = vunpack.c.l.b16 %v230
    %v270 = vunpack.c.l.b16 %v231
    %v271 = vunpack.c.l.b16 %v232
    %v272 = vunpack.c.l.b16 %v233
    %v273 = vunpack.c.l.b16 %v234
    %v274 = vunpack.c.l.b16 %v235
    %v275 = vunpack.c.l.b16 %v236
    %v276 = vunpack.c.l.b16 %v237
    %v277 = vunpack.c.l.b16 %v238
    %v278 = vunpack.c.l.b16 %v239
    %v279 = vpack.c.b16 %v264, %v263
    %v280 = vpack.c.b16 %v266, %v265
    %v281 = vpack.c.b16 %v268, %v267
    %v282 = vpack.c.b16 %v270, %v269
    %v283 = vpack.c.b16 %v272, %v271
    %v284 = vpack.c.b16 %v274, %v273
    %v285 = vpack.c.b16 %v276, %v275
    %v286 = vpack.c.b16 %v278, %v277
    %295 = vmatprep.subr.bf16.mxu0 0
    %296 = vmatpush1.bf16.msra.mxu0 %v279
    %297 = vmatprep.subr.bf16.mxu0 0
    %298 = vmatpush1.bf16.msra.mxu0 %v280
    %299 = vmatprep.subr.bf16.mxu0 0
    %300 = vmatpush1.bf16.msra.mxu0 %v281
    %301 = vmatprep.subr.bf16.mxu0 0
    %302 = vmatpush1.bf16.msra.mxu0 %v282
    %303 = vmatprep.subr.bf16.mxu0 0
    %304 = vmatpush1.bf16.msra.mxu0 %v283
    %305 = vmatprep.subr.bf16.mxu0 0
    %306 = vmatpush1.bf16.msra.mxu0 %v284
    %307 = vmatprep.subr.bf16.mxu0 0
    %308 = vmatpush1.bf16.msra.mxu0 %v285
    %309 = vmatprep.subr.bf16.mxu0 0
    %310 = vmatpush1.bf16.msra.mxu0 %v286
    %311 = vmatprep.subr.bf16.mxu0 0
    %312 = vmatpush1.bf16.msra.mxu0 0
    %313 = vmatprep.subr.bf16.mxu0 0
    %314 = vmatpush1.bf16.msra.mxu0 0
    %315 = vmatprep.subr.bf16.mxu0 0
    %316 = vmatpush1.bf16.msra.mxu0 0
    %317 = vmatprep.subr.bf16.mxu0 0
    %318 = vmatpush1.bf16.msra.mxu0 0
    %319 = vmatprep.subr.bf16.mxu0 0
    %320 = vmatpush1.bf16.msra.mxu0 0
    %321 = vmatprep.subr.bf16.mxu0 0
    %322 = vmatpush1.bf16.msra.mxu0 0
    %323 = vmatprep.subr.bf16.mxu0 0
    %324 = vmatpush1.bf16.msra.mxu0 0
    %325 = vmatprep.subr.bf16.mxu0 0
    %326 = vmatpush1.bf16.msra.mxu0 0
    %327 = vmatprep.mubr.bf16.mxu0 0
    %328 = vmatmul.mubr.bf16.gmra.mrb[0].mxu0 %v223
    %v329 = vpop.f32.mrb[0].mxu0
    %v330 = vadd.f32 %v245, %v329
    %v331 = vpop.f32.mrb[0].mxu0
    %v332 = vpop.f32.mrb[0].mxu0
    %v333 = vpop.f32.mrb[0].mxu0
    %334 = vdwg.mxu0
    %v335 = vmax.f32 %v330, 0.0
    %v336 = vmul.f32 %v335, %v37
    %v337 = vpack.c.bf16 %v336, %v336
    %v338 = vld [vmem:[%s5] sm:$0xf]
    %v339 = vld [vmem:[%s5 + $0x4] sm:$0xf]
    %v340 = vld [vmem:[%s5 + $0x8] sm:$0xf]
    %v341 = vld [vmem:[%s5 + $0xc] sm:$0xf]
    %v342 = vld [vmem:[%s5 + $0x10] sm:$0xf]
    %v343 = vld [vmem:[%s5 + $0x14] sm:$0xf]
    %v344 = vld [vmem:[%s5 + $0x18] sm:$0xf]
    %v345 = vld [vmem:[%s5 + $0x1c] sm:$0xf]
    %v346 = vld [vmem:[%s6] sm:$0x1]
    %v348 = vlaneseq
    %v349 = vshrl.u32 %v348, 7
    %v350 = vsub.s32 0, %v349
    %v351 = vrot.slane %v346, %v350
    %v361 = vunpack.c.l.b16 %v338
    %v362 = vunpack.c.l.b16 %v339
    %v363 = vunpack.c.l.b16 %v340
    %v364 = vunpack.c.l.b16 %v341
    %v365 = vunpack.c.l.b16 %v342
    %v366 = vunpack.c.l.b16 %v343
    %v367 = vunpack.c.l.b16 %v344
    %v368 = vunpack.c.l.b16 %v345
    %v369 = vpack.c.b16 %v362, %v361
    %v370 = vpack.c.b16 %v364, %v363
    %v371 = vpack.c.b16 %v366, %v365
    %v372 = vpack.c.b16 %v368, %v367
    %vm377 = vcmask 523264
    %v379 = vsel %vm377, %v337, 0
    %381 = vmatprep.subr.bf16.mxu0 0
    %382 = vmatpush1.bf16.msra.mxu0 %v369
    %383 = vmatprep.subr.bf16.mxu0 0
    %384 = vmatpush1.bf16.msra.mxu0 %v370
    %385 = vmatprep.subr.bf16.mxu0 0
    %386 = vmatpush1.bf16.msra.mxu0 %v371
    %387 = vmatprep.subr.bf16.mxu0 0
    %388 = vmatpush1.bf16.msra.mxu0 %v372
    %389 = vmatprep.subr.bf16.mxu0 0
    %390 = vmatpush1.bf16.msra.mxu0 0
    %391 = vmatprep.subr.bf16.mxu0 0
    %392 = vmatpush1.bf16.msra.mxu0 0
    %393 = vmatprep.subr.bf16.mxu0 0
    %394 = vmatpush1.bf16.msra.mxu0 0
    %395 = vmatprep.subr.bf16.mxu0 0
    %396 = vmatpush1.bf16.msra.mxu0 0
    %397 = vmatprep.subr.bf16.mxu0 0
    %398 = vmatpush1.bf16.msra.mxu0 0
    %399 = vmatprep.subr.bf16.mxu0 0
    %400 = vmatpush1.bf16.msra.mxu0 0
    %401 = vmatprep.subr.bf16.mxu0 0
    %402 = vmatpush1.bf16.msra.mxu0 0
    %403 = vmatprep.subr.bf16.mxu0 0
    %404 = vmatpush1.bf16.msra.mxu0 0
    %405 = vmatprep.subr.bf16.mxu0 0
    %406 = vmatpush1.bf16.msra.mxu0 0
    %407 = vmatprep.subr.bf16.mxu0 0
    %408 = vmatpush1.bf16.msra.mxu0 0
    %409 = vmatprep.subr.bf16.mxu0 0
    %410 = vmatpush1.bf16.msra.mxu0 0
    %411 = vmatprep.subr.bf16.mxu0 0
    %412 = vmatpush1.bf16.msra.mxu0 0
    %413 = vmatprep.mubr.bf16.mxu0 0
    %414 = vmatmul.mubr.bf16.gmra.mrb[0].mxu0 %v379
    %v415 = vpop.f32.mrb[0].mxu0
    %v416 = vadd.f32 %v351, %v415
    %v417 = vpop.f32.mrb[0].mxu0
    %v418 = vpop.f32.mrb[0].mxu0
    %v419 = vpop.f32.mrb[0].mxu0
    %420 = vdwg.mxu0
    %vm421 = vcmask 130048
    %422 = vst.msk [vmem:[#allocation2] sm:$0xff] %vm421, %v416
    // Predicated region
    $region38: #{tpu_custom_call.1} parent=1 // pred_check
      _
    $region39: #{tpu_custom_call.1} parent=1 // pred_check_branch
      %424 = sbr.rel (0) target = $region41
    $region40: #{tpu_custom_call.1} parent=1 // pred_region
      %s426 = ssub.s32 128, 128
      %427 = vsyncadd [#allocation3], %s426
      %s429 = sshll.u32 [#allocation2], 4
      %s430 = int_to_ptr.vmem [resolvable:$true] %s429
      %432 = dma.vmem_to_hbm [thread:$0]  %s430, 128, %s9, [#allocation3]
    $region41: #{tpu_custom_call.1} parent=1 // pred_fallthru
      _
    // Predicated region
    $region42: #{tpu_custom_call.1} parent=1 // pred_check
      _
    $region43: #{tpu_custom_call.1} parent=1 // pred_check_branch
      %434 = sbr.rel (0) target = $region45
    $region44: #{tpu_custom_call.1} parent=1 // pred_region
      %435 = dma.done [#allocation3], 128
    $region45: #{tpu_custom_call.1} parent=1 // pred_fallthru
      _
    %436 = vsyncpa [#allocation3], 1

</llo_original>
